<compile_context>
chip_gen: v7x
topology: tpu7x:2x2x1
jax: 0.10.0
libtpu: 0.0.40
codegen_flags: <defaults>
</compile_context>

<pallas_src>
import jax
import jax.numpy as jnp
from jax.experimental import pallas as pl
from jax.experimental.pallas import tpu as pltpu


def _round_up(x: int, m: int) -> int:
    return ((x + m - 1) // m) * m


def _vmem_capacity_bytes() -> int:
    try:
        return int(pltpu.get_tpu_info().vmem_capacity_bytes)
    except Exception:
        return 64 << 20  # conservative fallback: v7x per-TensorCore VMEM


# ----------------------------- kernel bodies ------------------------------- #

def _highway_compute(x, x_res, w_ref, b_ref, o_ref):
    tn = o_ref.shape[-1]
    xq = x.astype(w_ref.dtype)  # bf16 (mxu dtype) operand for the MXU, cast in VMEM
    # One fused MXU pass per tile: [proj | gate] columns, f32 accumulation.
    y = jnp.dot(xq, w_ref[...], preferred_element_type=jnp.float32) + b_ref[...]
    proj = jnp.maximum(y[:, :tn], 0.0)                             # relu   (VPU)
    gate = pl.reciprocal(1.0 + jnp.exp(-y[:, tn:]), approx=True)   # sigmoid (EUP)
    xr = x_res.astype(jnp.float32)                                 # f32 residual
    # gate*proj + (1-gate)*x  ==  x + gate*(proj - x)
    o_ref[...] = (xr + gate * (proj - xr)).astype(o_ref.dtype)


def _highway_kernel_resident(x_ref, w_ref, b_ref, o_ref):
    # Single column block (tn == Ep): the residual is the whole x tile.
    x = x_ref[...]
    _highway_compute(x, x, w_ref, b_ref, o_ref)


def _highway_kernel_coltiled(x_ref, xres_ref, w_ref, b_ref, o_ref):
    # Column-tiled weights: the residual arrives as its own (tm, tn) block.
    _highway_compute(x_ref[...], xres_ref[...], w_ref, b_ref, o_ref)


# ------------------------------- wrapper ----------------------------------- #

def highway_forward(x, w_proj, b_proj, w_gate, b_gate, *,
                    tm=None, tn=None, mxu_dtype=None, out_dtype=None):
    """x: (..., E). w_*: (E, E) PyTorch (out, in) convention. b_*: (E,).

    mxu_dtype: dtype fed to the MXU.  Defaults to bfloat16 for float32 inputs
    (f32 accumulate + f32 residual), which is the native fast MXU path on
    v5e/v6e/v7x.  out_dtype defaults to x.dtype.
    """
    orig_shape = x.shape
    E = orig_shape[-1]
    x2d = x.reshape(-1, E)
    N = x2d.shape[0]

    out_dtype = jnp.dtype(x.dtype) if out_dtype is None else jnp.dtype(out_dtype)
    if mxu_dtype is None:
        mxu_dtype = jnp.bfloat16 if x.dtype == jnp.float32 else x.dtype
    mxu_dtype = jnp.dtype(mxu_dtype)

    x_bytes = jnp.dtype(x.dtype).itemsize
    w_bytes = mxu_dtype.itemsize
    o_bytes = out_dtype.itemsize

    # ---- Lane-dense feature axis; pad only when E is not a multiple of 128. ----
    Ep = max(128, _round_up(E, 128))
    if Ep != E:
        x_in = jnp.zeros((N, Ep), x.dtype).at[:, :E].set(x2d)
    else:
        x_in = x2d                      # no extra HBM copy in the aligned case

    # ---- Generation-dependent VMEM budget. ----
    cap = _vmem_capacity_bytes()        # 128 MiB on v5e/v6e, 64 MiB on v7x
    vmem_limit = (cap * 3) // 4         # 96 MiB / 48 MiB scoped limit
    budget = (vmem_limit * 2) // 3      # 64 MiB / 32 MiB tile + weight budget

    # ---- Output-feature (column) tile: bound resident weight VMEM vs E. ----
    if tn is None:
        k = Ep // 128
        w_budget = budget // 2
        tn = 128
        for d in range(k, 0, -1):       # largest multiple of 128 dividing Ep
            if k % d:
                continue
            cand = 128 * d
            if 2 * Ep * (2 * cand) * w_bytes <= w_budget:   # double-buffered block
                tn = cand
                break
    assert tn % 128 == 0 and Ep % tn == 0, "tn must be a multiple of 128 dividing Ep"
    n_col = Ep // tn

    # ---- Fused weight / bias slabs: column block j = [Wp^T cols j | Wg^T cols j]. ----
    def pad_wT(w):
        wt = jnp.asarray(w).T.astype(mxu_dtype)
        if Ep != E:
            wt = jnp.zeros((Ep, Ep), mxu_dtype).at[:E, :E].set(wt)
        return wt

    def pad_b(b):
        bf = jnp.asarray(b).astype(jnp.float32)
        if Ep != E:
            bf = jnp.zeros((Ep,), jnp.float32).at[:E].set(bf)
        return bf

    wpT, wgT = pad_wT(w_proj), pad_wT(w_gate)
    w_fused = jnp.concatenate(
        [wpT.reshape(Ep, n_col, 1, tn), wgT.reshape(Ep, n_col, 1, tn)], axis=2
    ).reshape(Ep, 2 * Ep)
    b_fused = jnp.concatenate(
        [pad_b(b_proj).reshape(n_col, 1, tn), pad_b(b_gate).reshape(n_col, 1, tn)], axis=1
    ).reshape(1, 2 * Ep)

    # ---- Row tile from an accurate VMEM footprint estimate. ----
    row_mult = 8 if w_bytes >= 4 else (16 if w_bytes == 2 else 32)
    if tm is None:
        w_vmem = 2 * (Ep * (2 * tn) * w_bytes + (2 * tn) * 4)  # W + bias, double-buffered
        res_rows = (2 * tn * x_bytes) if n_col > 1 else 0      # residual tile (col-tiled only)
        per_row = (2 * Ep * x_bytes      # x row tile, double-buffered
                   + Ep * w_bytes        # in-kernel mxu-dtype cast of x
                   + res_rows
                   + 2 * tn * o_bytes    # output tile, double-buffered
                   + 2 * tn * 4          # f32 fused matmul result y
                   + 3 * tn * 4)         # proj / gate / residual f32 temps
        avail = max(budget - w_vmem, row_mult * per_row)
        tm_budget = min(int(avail // per_row), 1024)
        tm_steps = _round_up(pl.cdiv(N, 8), row_mult)          # aim for ~8 row steps
        tm_floor = min(256, _round_up(N, row_mult))            # but keep >= 256 rows
        tm = min(tm_budget, max(tm_steps, tm_floor), _round_up(N, row_mult))
        tm = max(row_mult, (tm // row_mult) * row_mult)
    else:
        tm = max(8, (int(tm) // 8) * 8)

    n_row = pl.cdiv(N, tm)
    grid = (n_col, n_row)               # column axis OUTER: weight block reused across rows

    # ---- Specs / kernel variant. ----
    x_spec = pl.BlockSpec((tm, Ep), lambda j, i: (i, 0))
    w_spec = pl.BlockSpec((Ep, 2 * tn), lambda j, i: (0, j))
    b_spec = pl.BlockSpec((1, 2 * tn), lambda j, i: (0, j))
    o_spec = pl.BlockSpec((tm, tn), lambda j, i: (i, j))
    if n_col == 1:
        kernel = _highway_kernel_resident
        in_specs = [x_spec, w_spec, b_spec]
        operands = (x_in, w_fused, b_fused)
    else:
        xres_spec = pl.BlockSpec((tm, tn), lambda j, i: (i, j))
        kernel = _highway_kernel_coltiled
        in_specs = [x_spec, xres_spec, w_spec, b_spec]
        operands = (x_in, x_in, w_fused, b_fused)

    cost = pl.CostEstimate(
        flops=int(4 * N * Ep * Ep),                           # two ExE matmuls per row
        transcendentals=int(N * Ep),                          # exp in the gate sigmoid
        bytes_accessed=int(N * Ep * x_bytes + 2 * Ep * Ep * w_bytes
                           + 2 * Ep * 4 + N * Ep * o_bytes),
    )

    out = pl.pallas_call(
        kernel,
        out_shape=jax.ShapeDtypeStruct((N, Ep), out_dtype),
        grid_spec=pltpu.PrefetchScalarGridSpec(
            num_scalar_prefetch=0,
            grid=grid,
            in_specs=in_specs,
            out_specs=o_spec,
        ),
        compiler_params=pltpu.CompilerParams(
            dimension_semantics=("parallel", "parallel"),
            vmem_limit_bytes=int(vmem_limit),
        ),
        cost_estimate=cost,
    )(*operands)

    if Ep != E:
        out = out[:, :E]
    return out.reshape(orig_shape)


def highway_reference(x, w_proj, b_proj, w_gate, b_gate):
    x_proj = jax.nn.relu(x @ w_proj.T + b_proj)
    x_gate = jax.nn.sigmoid(x @ w_gate.T + b_gate)
    return x_gate * x_proj + (1.0 - x_gate) * x


if __name__ == "__main__":
    key = jax.random.PRNGKey(0)
    keys = jax.random.split(key, 11)

    # ---- Primary case: shapes implied by the assignment (seq, batch, w_embed). ----
    seq, batch, w_embed = 8, 2, 32
    x = jax.random.normal(keys[0], (seq, batch, w_embed), dtype=jnp.float32)
    bound = 1.0 / (w_embed ** 0.5)
    w_proj = jax.random.uniform(keys[1], (w_embed, w_embed), jnp.float32, -bound, bound)
    b_proj = jax.random.uniform(keys[2], (w_embed,), jnp.float32, -bound, bound)
    w_gate = jax.random.uniform(keys[3], (w_embed, w_embed), jnp.float32, -bound, bound)
    b_gate = jax.random.uniform(keys[4], (w_embed,), jnp.float32, -bound, bound)

    out = jax.block_until_ready(highway_forward(x, w_proj, b_proj, w_gate, b_gate))
    ref = highway_reference(x, w_proj, b_proj, w_gate, b_gate)
    assert out.shape == x.shape and out.dtype == x.dtype
    # bf16 MXU operands + approximate EUP reciprocal in the sigmoid -> loose tolerance.
    assert jnp.allclose(out, ref, atol=3e-2, rtol=3e-2), "mismatch vs reference (default)"

    # ---- Stress case: E not a multiple of 128 (feature pad), ragged row count,
    # multi-block grid in both row and column axes (forced small tm / tn). ----
    seq2, batch2, E2 = 7, 5, 160
    x2 = jax.random.normal(keys[5], (seq2, batch2, E2), dtype=jnp.float32)
    bound2 = 1.0 / (E2 ** 0.5)
    w_proj2 = jax.random.uniform(keys[6], (E2, E2), jnp.float32, -bound2, bound2)
    b_proj2 = jax.random.uniform(keys[7], (E2,), jnp.float32, -bound2, bound2)
    w_gate2 = jax.random.uniform(keys[8], (E2, E2), jnp.float32, -bound2, bound2)
    b_gate2 = jax.random.uniform(keys[9], (E2,), jnp.float32, -bound2, bound2)

    out2 = jax.block_until_ready(
        highway_forward(x2, w_proj2, b_proj2, w_gate2, b_gate2, tm=16, tn=128))
    ref2 = highway_reference(x2, w_proj2, b_proj2, w_gate2, b_gate2)
    assert out2.shape == x2.shape
    assert jnp.allclose(out2, ref2, atol=3e-2, rtol=3e-2), "mismatch vs reference (tiled)"

    print("KERNEL_OK")
</pallas_src>

<mosaic_0001>
module attributes {stable_mosaic.version = 11 : i64} {
  func.func @_highway_kernel_resident(%arg0: i32, %arg1: i32, %arg2: memref<16x128xf32, #tpu.memory_space<vmem>>, %arg3: memref<128x256xbf16, #tpu.memory_space<vmem>>, %arg4: memref<1x256xf32, #tpu.memory_space<vmem>>, %arg5: memref<16x128xf32, #tpu.memory_space<vmem>>) attributes {dimension_semantics = [#tpu.dimension_semantics<parallel>, #tpu.dimension_semantics<parallel>], iteration_bounds = array<i64: 1, 1>, scalar_prefetch = 0 : i64, scratch_operands = 0 : i64, tpu.core_type = #tpu.core_type<tc>, window_params = [{transform_indices = @transform_0, window_bounds = array<i64: 16, 128>}, {transform_indices = @transform_1, window_bounds = array<i64: 128, 256>}, {transform_indices = @transform_2, window_bounds = array<i64: 1, 256>}, {transform_indices = @transform_3, window_bounds = array<i64: 16, 128>}]} {
    %c0 = arith.constant 0 : index
    %c0_0 = arith.constant 0 : index
    %0 = vector.load %arg2[%c0, %c0_0] : memref<16x128xf32, #tpu.memory_space<vmem>>, vector<16x128xf32>
    %1 = arith.truncf %0 : vector<16x128xf32> to vector<16x128xbf16>
    %c0_1 = arith.constant 0 : index
    %c0_2 = arith.constant 0 : index
    %2 = vector.load %arg3[%c0_1, %c0_2] : memref<128x256xbf16, #tpu.memory_space<vmem>>, vector<128x256xbf16>
    %cst = arith.constant dense<0.000000e+00> : vector<16x256xf32>
    %3 = tpu.matmul %1, %2, %cst {dimension_numbers = #tpu.dot_dimension_numbers<[1], [0], [0], [1], [0, 0, 1, 1], [], []>} : vector<16x128xbf16>, vector<128x256xbf16>, vector<16x256xf32> -> vector<16x256xf32>
    %c0_3 = arith.constant 0 : index
    %c0_4 = arith.constant 0 : index
    %4 = vector.load %arg4[%c0_3, %c0_4] : memref<1x256xf32, #tpu.memory_space<vmem>>, vector<1x256xf32>
    %5 = vector.broadcast %4 : vector<1x256xf32> to vector<16x256xf32>
    %6 = arith.addf %3, %5 : vector<16x256xf32>
    %7 = vector.extract_strided_slice %6 {offsets = [0, 0], sizes = [16, 128], strides = [1, 1]} : vector<16x256xf32> to vector<16x128xf32>
    %cst_5 = arith.constant 0.000000e+00 : f32
    %8 = vector.broadcast %cst_5 : f32 to vector<16x128xf32>
    %9 = arith.maximumf %7, %8 : vector<16x128xf32>
    %10 = vector.extract_strided_slice %6 {offsets = [0, 128], sizes = [16, 128], strides = [1, 1]} : vector<16x256xf32> to vector<16x128xf32>
    %cst_6 = arith.constant 0.000000e+00 : f32
    %11 = vector.broadcast %cst_6 : f32 to vector<16x128xf32>
    %12 = arith.subf %11, %10 : vector<16x128xf32>
    %13 = math.exp %12 : vector<16x128xf32>
    %cst_7 = arith.constant 1.000000e+00 : f32
    %14 = vector.broadcast %cst_7 : f32 to vector<16x128xf32>
    %15 = arith.addf %14, %13 : vector<16x128xf32>
    %16 = tpu.reciprocal %15 {approx = true} : vector<16x128xf32> -> vector<16x128xf32>
    %17 = arith.subf %9, %0 : vector<16x128xf32>
    %18 = arith.mulf %16, %17 : vector<16x128xf32>
    %19 = arith.addf %0, %18 : vector<16x128xf32>
    %c0_8 = arith.constant 0 : index
    %c0_9 = arith.constant 0 : index
    %20 = vector.load %arg5[%c0_8, %c0_9] : memref<16x128xf32, #tpu.memory_space<vmem>>, vector<16x128xf32>
    tpu.vector_store %arg5[%c0_8, %c0_9], %19 {strides = array<i32>} : memref<16x128xf32, #tpu.memory_space<vmem>>, vector<16x128xf32>,
    return
  }
  func.func @transform_0(%arg0: i32, %arg1: i32) -> (i32, i32) {
    %c0_i32 = arith.constant 0 : i32
    %c0_i32_0 = arith.constant 0 : i32
    return %arg1, %c0_i32 : i32, i32
  }
  func.func @transform_1(%arg0: i32, %arg1: i32) -> (i32, i32) {
    %c0_i32 = arith.constant 0 : i32
    %c0_i32_0 = arith.constant 0 : i32
    return %c0_i32, %arg0 : i32, i32
  }
  func.func @transform_2(%arg0: i32, %arg1: i32) -> (i32, i32) {
    %c0_i32 = arith.constant 0 : i32
    %c0_i32_0 = arith.constant 0 : i32
    return %c0_i32, %arg0 : i32, i32
  }
  func.func @transform_3(%arg0: i32, %arg1: i32) -> (i32, i32) {
    %c0_i32 = arith.constant 0 : i32
    return %arg1, %arg0 : i32, i32
  }
}

</mosaic_0001>

<llo_original>
// kernel: tpu_custom_call.1
$region0: #{tpu_custom_call.1}
  #allocation0 [shape = 'u32[]', space=smem, size = 0x4, offset = 0x4, fixed_abs, tag = 'smem constant byte address 0x4 - core index']
  #allocation1 [shape = 'u32[144,128]{1,0:T(1,128)}', space=vmem, size = 0x12000, scoped, tag = 'internal scratch']
  %s0 = inlined_call_operand.hbm [shape: f32[16,128], index: 0, kind: input, shape index: {}]
  %s1 = inlined_call_operand.hbm [shape: bf16[128,256], index: 1, kind: input, shape index: {}]
  %s2 = inlined_call_operand.vmem [shape: f32[1,256], index: 2, kind: input, shape index: {}]
  %s3 = inlined_call_operand.hbm [shape: f32[16,128], index: 3, kind: output, shape index: {}]
  %s4 = sld [smem:[#allocation0]]
  $region30: #{tpu_custom_call.1} parent=0
    _
  %s6 = ssub.s32 1, %s4
  %s7 = scalar_select 0, %s6, %s4
  $region1: #{tpu_custom_call.1} parent=0
    #allocation2 [shape = 'u8[8192]{0}', space=vmem, size = 0x2000, scoped, tag = 'input window, operand 0, single buffered']
    #allocation3 [shape = 's32[1]{0}', space=sflag, size = 0x4, scoped, tag = 'scoped memory for tpu_custom_call.1']
    #allocation4 [shape = 's32[1]{0}', space=sflag, size = 0x4, scoped, tag = 'scoped memory for tpu_custom_call.1']
    #allocation5 [shape = 'u8[65536]{0}', space=vmem, size = 0x10000, scoped, tag = 'input window, operand 1, single buffered']
    #allocation6 [shape = 's32[1]{0}', space=sflag, size = 0x4, scoped, tag = 'scoped memory for tpu_custom_call.1']
    #allocation7 [shape = 'u8[8192]{0}', space=vmem, size = 0x2000, scoped, tag = 'output window, operand 0, single buffered']
    %8 = vsyncpa [#allocation3], 0
    %9 = vsyncpa [#allocation6], 0
    %10 = vsyncpa [#allocation4], 0
    // Predicated region
    $region2: #{tpu_custom_call.1} parent=1 // pred_check
      _
    $region3: #{tpu_custom_call.1} parent=1 // pred_check_branch
      %12 = sbr.rel (0) target = $region5
    $region4: #{tpu_custom_call.1} parent=1 // pred_region
      %s14 = ssub.s32 256, 256
      %15 = vsyncadd [#allocation3], %s14
      %s16 = sshll.u32 [#allocation2], 4
      %s17 = int_to_ptr.vmem [resolvable:$true] %s16
      %22 = dma.hbm_to_vmem [thread:$0]  %s0, 256, %s17, [#allocation3], 128, 128, 8
    $region5: #{tpu_custom_call.1} parent=1 // pred_fallthru
      _
    // Predicated region
    $region6: #{tpu_custom_call.1} parent=1 // pred_check
      _
    $region7: #{tpu_custom_call.1} parent=1 // pred_check_branch
      %24 = sbr.rel (0) target = $region9
    $region8: #{tpu_custom_call.1} parent=1 // pred_region
      %s26 = ssub.s32 2048, 2048
      %27 = vsyncadd [#allocation6], %s26
      %s28 = sshll.u32 [#allocation5], 4
      %s29 = int_to_ptr.vmem [resolvable:$true] %s28
      %34 = dma.hbm_to_vmem [thread:$0]  %s1, 2048, %s29, [#allocation6], 128, 128, 8
    $region9: #{tpu_custom_call.1} parent=1 // pred_fallthru
      _
    // Predicated region
    $region10: #{tpu_custom_call.1} parent=1 // pred_check
      _
    $region11: #{tpu_custom_call.1} parent=1 // pred_check_branch
      %36 = sbr.rel (0) target = $region13
    $region12: #{tpu_custom_call.1} parent=1 // pred_region
      _
    $region13: #{tpu_custom_call.1} parent=1 // pred_fallthru
      _
    // Predicated region
    $region14: #{tpu_custom_call.1} parent=1 // pred_check
      _
    $region15: #{tpu_custom_call.1} parent=1 // pred_check_branch
      %38 = sbr.rel (0) target = $region17
    $region16: #{tpu_custom_call.1} parent=1 // pred_region
      %39 = dma.done [#allocation3], 256
    $region17: #{tpu_custom_call.1} parent=1 // pred_fallthru
      _
    // Predicated region
    $region18: #{tpu_custom_call.1} parent=1 // pred_check
      _
    $region19: #{tpu_custom_call.1} parent=1 // pred_check_branch
      %41 = sbr.rel (0) target = $region21
    $region20: #{tpu_custom_call.1} parent=1 // pred_region
      %42 = dma.done [#allocation6], 2048
    $region21: #{tpu_custom_call.1} parent=1 // pred_fallthru
      _
    %v44 = vld [vmem:[#allocation2] sm:$0xff]
    %v45 = vld [vmem:[#allocation2 + $0x8] sm:$0xff]
    %v46 = vpack.c.bf16 %v45, %v44
    %v47 = vld [vmem:[#allocation5] sm:$0xff]
    %v48 = vld [vmem:[#allocation5 + $0x8] sm:$0xff]
    %v49 = vld [vmem:[#allocation5 + $0x10] sm:$0xff]
    %v50 = vld [vmem:[#allocation5 + $0x18] sm:$0xff]
    %v51 = vld [vmem:[#allocation5 + $0x20] sm:$0xff]
    %v52 = vld [vmem:[#allocation5 + $0x28] sm:$0xff]
    %v53 = vld [vmem:[#allocation5 + $0x30] sm:$0xff]
    %v54 = vld [vmem:[#allocation5 + $0x38] sm:$0xff]
    %v55 = vld [vmem:[#allocation5 + $0x40] sm:$0xff]
    %v56 = vld [vmem:[#allocation5 + $0x48] sm:$0xff]
    %v57 = vld [vmem:[#allocation5 + $0x50] sm:$0xff]
    %v58 = vld [vmem:[#allocation5 + $0x58] sm:$0xff]
    %v59 = vld [vmem:[#allocation5 + $0x60] sm:$0xff]
    %v60 = vld [vmem:[#allocation5 + $0x68] sm:$0xff]
    %v61 = vld [vmem:[#allocation5 + $0x70] sm:$0xff]
    %v62 = vld [vmem:[#allocation5 + $0x78] sm:$0xff]
    %v63 = vld [vmem:[%s2] sm:$0x3]
    %v65 = vlaneseq
    %v66 = vshrl.u32 %v65, 7
    %v67 = vsub.s32 0, %v66
    %v68 = vrot.slane %v63, %v67
    %v69 = vlaneseq
    %v70 = vshrl.u32 %v69, 7
    %v71 = vsub.s32 1, %v70
    %v72 = vrot.slane %v63, %v71
    %v91 = vunpack.c.l.b16 %v47
    %v92 = vunpack.c.h.b16 %v47
    %v93 = vunpack.c.l.b16 %v48
    %v94 = vunpack.c.h.b16 %v48
    %v95 = vunpack.c.l.b16 %v49
    %v96 = vunpack.c.h.b16 %v49
    %v97 = vunpack.c.l.b16 %v50
    %v98 = vunpack.c.h.b16 %v50
    %v99 = vunpack.c.l.b16 %v51
    %v100 = vunpack.c.h.b16 %v51
    %v101 = vunpack.c.l.b16 %v52
    %v102 = vunpack.c.h.b16 %v52
    %v103 = vunpack.c.l.b16 %v53
    %v104 = vunpack.c.h.b16 %v53
    %v105 = vunpack.c.l.b16 %v54
    %v106 = vunpack.c.h.b16 %v54
    %v107 = vunpack.c.l.b16 %v55
    %v108 = vunpack.c.h.b16 %v55
    %v109 = vunpack.c.l.b16 %v56
    %v110 = vunpack.c.h.b16 %v56
    %v111 = vunpack.c.l.b16 %v57
    %v112 = vunpack.c.h.b16 %v57
    %v113 = vunpack.c.l.b16 %v58
    %v114 = vunpack.c.h.b16 %v58
    %v115 = vunpack.c.l.b16 %v59
    %v116 = vunpack.c.h.b16 %v59
    %v117 = vunpack.c.l.b16 %v60
    %v118 = vunpack.c.h.b16 %v60
    %v119 = vunpack.c.l.b16 %v61
    %v120 = vunpack.c.h.b16 %v61
    %v121 = vunpack.c.l.b16 %v62
    %v122 = vunpack.c.h.b16 %v62
    %v123 = vpack.c.b16 %v93, %v91
    %v124 = vpack.c.b16 %v94, %v92
    %v125 = vpack.c.b16 %v97, %v95
    %v126 = vpack.c.b16 %v98, %v96
    %v127 = vpack.c.b16 %v101, %v99
    %v128 = vpack.c.b16 %v102, %v100
    %v129 = vpack.c.b16 %v105, %v103
    %v130 = vpack.c.b16 %v106, %v104
    %v131 = vpack.c.b16 %v109, %v107
    %v132 = vpack.c.b16 %v110, %v108
    %v133 = vpack.c.b16 %v113, %v111
    %v134 = vpack.c.b16 %v114, %v112
    %v135 = vpack.c.b16 %v117, %v115
    %v136 = vpack.c.b16 %v118, %v116
    %v137 = vpack.c.b16 %v121, %v119
    %v138 = vpack.c.b16 %v122, %v120
    %155 = vmatprep.subr.bf16.mxu0 %v124
    %156 = vmatpush1.bf16.msra.mxu0 %v123
    %157 = vmatprep.subr.bf16.mxu0 %v126
    %158 = vmatpush1.bf16.msra.mxu0 %v125
    %159 = vmatprep.subr.bf16.mxu0 %v128
    %160 = vmatpush1.bf16.msra.mxu0 %v127
    %161 = vmatprep.subr.bf16.mxu0 %v130
    %162 = vmatpush1.bf16.msra.mxu0 %v129
    %163 = vmatprep.subr.bf16.mxu0 %v132
    %164 = vmatpush1.bf16.msra.mxu0 %v131
    %165 = vmatprep.subr.bf16.mxu0 %v134
    %166 = vmatpush1.bf16.msra.mxu0 %v133
    %167 = vmatprep.subr.bf16.mxu0 %v136
    %168 = vmatpush1.bf16.msra.mxu0 %v135
    %169 = vmatprep.subr.bf16.mxu0 %v138
    %170 = vmatpush1.bf16.msra.mxu0 %v137
    %171 = vmatprep.subr.bf16.mxu0 0
    %172 = vmatpush1.bf16.msra.mxu0 0
    %173 = vmatprep.subr.bf16.mxu0 0
    %174 = vmatpush1.bf16.msra.mxu0 0
    %175 = vmatprep.subr.bf16.mxu0 0
    %176 = vmatpush1.bf16.msra.mxu0 0
    %177 = vmatprep.subr.bf16.mxu0 0
    %178 = vmatpush1.bf16.msra.mxu0 0
    %179 = vmatprep.subr.bf16.mxu0 0
    %180 = vmatpush1.bf16.msra.mxu0 0
    %181 = vmatprep.subr.bf16.mxu0 0
    %182 = vmatpush1.bf16.msra.mxu0 0
    %183 = vmatprep.subr.bf16.mxu0 0
    %184 = vmatpush1.bf16.msra.mxu0 0
    %185 = vmatprep.subr.bf16.mxu0 0
    %186 = vmatpush1.bf16.msra.mxu0 0
    %187 = vmatprep.mubr.bf16.mxu0 0
    %188 = vmatmul.mubr.bf16.gmra.mrb[0].mxu0 %v46
    %v189 = vpop.f32.mrb[0].mxu0
    %v190 = vadd.f32 %v68, %v189
    %v191 = vpop.f32.mrb[0].mxu0
    %v192 = vadd.f32 %v72, %v191
    %v193 = vpop.f32.mrb[0].mxu0
    %v194 = vadd.f32 %v68, %v193
    %v195 = vpop.f32.mrb[0].mxu0
    %v196 = vadd.f32 %v72, %v195
    %197 = vdwg.mxu0
    %v198 = vmax.f32 %v190, 0.0
    %v199 = vmax.f32 %v194, 0.0
    %v200 = vsub.f32 0.0, %v192
    %v201 = vsub.f32 0.0, %v196
    %v202 = vmul.f32 %v200, 1.442695
    %v203 = vpow.pop %v202
    %v204 = vmul.f32 %v201, 1.442695
    %v205 = vpow.pop %v204
    %v206 = vadd.f32 %v203, 1.0
    %v207 = vadd.f32 %v205, 1.0
    %v208 = vrcp.pop %v206
    %v209 = vrcp.pop %v207
    %v210 = vsub.f32 %v198, %v44
    %v211 = vsub.f32 %v199, %v45
    %v212 = vmul.f32 %v208, %v210
    %v213 = vmul.f32 %v209, %v211
    %v214 = vadd.f32 %v44, %v212
    %v215 = vadd.f32 %v45, %v213
    %216 = vst [vmem:[#allocation7] sm:$0xff] %v214
    %217 = vst [vmem:[#allocation7 + $0x8] sm:$0xff] %v215
    // Predicated region
    $region22: #{tpu_custom_call.1} parent=1 // pred_check
      _
    $region23: #{tpu_custom_call.1} parent=1 // pred_check_branch
      %219 = sbr.rel (0) target = $region25
    $region24: #{tpu_custom_call.1} parent=1 // pred_region
      %s221 = ssub.s32 256, 256
      %222 = vsyncadd [#allocation4], %s221
      %s223 = sshll.u32 [#allocation7], 4
      %s224 = int_to_ptr.vmem [resolvable:$true] %s223
      %229 = dma.vmem_to_hbm [thread:$0]  %s224, 256, %s3, [#allocation4], 128, 128, 8
    $region25: #{tpu_custom_call.1} parent=1 // pred_fallthru
      _
    // Predicated region
    $region26: #{tpu_custom_call.1} parent=1 // pred_check
      _
    $region27: #{tpu_custom_call.1} parent=1 // pred_check_branch
      %231 = sbr.rel (0) target = $region29
    $region28: #{tpu_custom_call.1} parent=1 // pred_region
      %232 = dma.done [#allocation4], 256
    $region29: #{tpu_custom_call.1} parent=1 // pred_fallthru
      _
    %233 = vsyncpa [#allocation3], 1
    %234 = vsyncpa [#allocation6], 1
    %235 = vsyncpa [#allocation4], 1

</llo_original>
